<compile_context>
chip_gen: v6e
topology: v6e:2x2x1
jax: 0.10.0
libtpu: 0.0.40
codegen_flags: <defaults>
</compile_context>

<pallas_src>
import math

import jax
import jax.numpy as jnp
from jax import lax
from jax.experimental import pallas as pl
from jax.experimental.pallas import tpu as pltpu


# ------------------------------ Pallas kernel ------------------------------

def _fused_kernel(x_ref, r_ref, qcat_ref, bias_ref, o_ref):
    """Fused conv1 -> conv2(center-cropped) -> add -> tanh, whole batch.

      x_ref    : (N, C_in, H, W)            raw NCHW input
      r_ref    : (3, N*H1, N*H)             [R ; S_up@R ; S_dn@R], batch block-diag
      qcat_ref : (3*C_in*W, LANES)          [Q ; Q@W2a ; Q@W2b], lane-padded
      bias_ref : (N*H1, LANES)              fully folded bias plane
      o_ref    : (N*H1, LANES)              (W1,C_out) flattened on lanes (padded)
    """
    x = x_ref[...]
    n, c_in, h, w = x.shape

    # (N, C_in, H, W) -> (N*H, C_in*W): samples stacked on sublanes,
    # channels concatenated on lanes (matches Q's row indexing ci*W + wi).
    xs = jnp.concatenate([x[:, ci, :, :] for ci in range(c_in)], axis=-1)
    xs = xs.reshape(n * h, c_in * w)

    # Three tiny left products (M = N*H1 = 18, K = N*H = 32, N = C_in*W = 32).
    z0 = jnp.dot(r_ref[0], xs, preferred_element_type=jnp.float32)
    z1 = jnp.dot(r_ref[1], xs, preferred_element_type=jnp.float32)
    z2 = jnp.dot(r_ref[2], xs, preferred_element_type=jnp.float32)
    zcat = jnp.concatenate([z0, z1, z2], axis=-1)        # (N*H1, 3*C_in*W)

    # One lane-dense MXU pass over the folded right matrices + bias + tanh.
    pre = jnp.dot(zcat, qcat_ref[...], preferred_element_type=jnp.float32)
    o_ref[...] = jnp.tanh(pre + bias_ref[...])


# ---------------- constant construction (hoisted, runs ONCE) ----------------

def make_forward(params, x_shape):
    """Builds all constant matrices once and returns a jitted forward(x)."""
    wc1, bc1 = params["wc1"], params["bc1"]   # (16, 2, 1, 2), (16,)
    wc2, bc2 = params["wc2"], params["bc2"]   # (16, 16, 2, 1), (16,)

    n, c_in, h, w = x_shape
    c_out = wc1.shape[0]
    f32 = jnp.float32

    # conv1 geometry: kernel (1,2), stride (2,1), padding (1,2)
    ph1, pw1, sh1, kw1 = 1, 2, 2, 2
    h1 = (h + 2 * ph1 - 1) // sh1 + 1          # 9
    w1o = (w + 2 * pw1 - kw1) + 1              # 19
    lanes_raw = w1o * c_out                    # 304
    lanes = ((lanes_raw + 127) // 128) * 128   # 384  (3 x 128, lane-dense)
    lane_pad = lanes - lanes_raw

    # ---- left selectors -----------------------------------------------------
    # R[ho, hi] = 1 iff hi == 2*ho - 1   (conv1 H stride + zero-pad row)
    r_mat = (jnp.arange(h)[None, :] == (2 * jnp.arange(h1)[:, None] - 1)).astype(f32)
    # conv2 (kh=0 -> row ho-1, kh=1 -> row ho+1), zero at the H1 boundaries.
    s_up = (jnp.arange(h1)[None, :] == (jnp.arange(h1)[:, None] - 1)).astype(f32)
    s_dn = (jnp.arange(h1)[None, :] == (jnp.arange(h1)[:, None] + 1)).astype(f32)
    eye_n = jnp.eye(n, dtype=f32)
    # Batch block-diagonal so samples never mix and shifts never wrap.
    r_big = jnp.stack(
        [jnp.kron(eye_n, r_mat),
         jnp.kron(eye_n, s_up @ r_mat),
         jnp.kron(eye_n, s_dn @ r_mat)], axis=0)          # (3, N*H1, N*H)

    # ---- conv1 right matrix Q ----------------------------------------------
    # Q[(ci*W + wi), (wo*C + co)] = sum_kw wc1[co,ci,0,kw] * [wi == wo + kw - pw1]
    wi = jnp.arange(w)[:, None]
    wo = jnp.arange(w1o)[None, :]
    q_blocks = []
    for ci in range(c_in):
        q_ci = jnp.zeros((w, lanes_raw), f32)
        for kw in range(kw1):
            t_kw = (wi == (wo + kw - pw1)).astype(f32)                 # (W, W1)
            q_ci = q_ci + jnp.kron(t_kw, wc1[:, ci, 0, kw][None, :])   # (W, W1*C)
        q_blocks.append(q_ci)
    q_raw = jnp.concatenate(q_blocks, axis=0)              # (C_in*W, W1*C)

    # ---- pre-fold conv2 into the right matrices ------------------------------
    t_a = wc2[:, :, 0, 0].T                                # (ci, co), tap ho-1
    t_b = wc2[:, :, 1, 0].T                                # (ci, co), tap ho+1
    qr = q_raw.reshape(c_in * w, w1o, c_out)
    qa_raw = (qr @ t_a).reshape(c_in * w, lanes_raw)       # Q folded w/ tap a
    qb_raw = (qr @ t_b).reshape(c_in * w, lanes_raw)       # Q folded w/ tap b

    # ---- fully folded bias plane ---------------------------------------------
    b1_row = jnp.tile(bc1, w1o)
    b2_row = jnp.tile(bc2, w1o)
    ba_row = jnp.tile(bc1 @ t_a, w1o)                      # b1 through conv2 tap a
    bb_row = jnp.tile(bc1 @ t_b, w1o)                      # b1 through conv2 tap b
    mask_up = (jnp.arange(h1) >= 1).astype(f32)[:, None]       # ho-1 exists
    mask_dn = (jnp.arange(h1) <= h1 - 2).astype(f32)[:, None]  # ho+1 exists
    bias_plane = ((b1_row + b2_row)[None, :]
                  + mask_up * ba_row[None, :]
                  + mask_dn * bb_row[None, :])             # (H1, W1*C)
    bias_big = jnp.tile(bias_plane, (n, 1))                # (N*H1, W1*C)

    # ---- lane padding to a multiple of 128 -----------------------------------
    def padl(m):
        return jnp.pad(m, ((0, 0), (0, lane_pad)))

    qcat = jnp.concatenate([padl(q_raw), padl(qa_raw), padl(qb_raw)], axis=0)
    bias_big = padl(bias_big)

    nh1 = n * h1
    nh = n * h
    kdim = 3 * c_in * w

    @jax.jit
    def forward(x_nchw):
        out_flat = pl.pallas_call(
            _fused_kernel,
            out_shape=jax.ShapeDtypeStruct((nh1, lanes), f32),
            grid=(1,),
            in_specs=[
                pl.BlockSpec((n, c_in, h, w), lambda i: (0, 0, 0, 0)),
                pl.BlockSpec((3, nh1, nh), lambda i: (0, 0, 0)),
                pl.BlockSpec((kdim, lanes), lambda i: (0, 0)),
                pl.BlockSpec((nh1, lanes), lambda i: (0, 0)),
            ],
            out_specs=pl.BlockSpec((nh1, lanes), lambda i: (0, 0)),
            compiler_params=pltpu.CompilerParams(
                dimension_semantics=("arbitrary",)),
        )(x_nchw.astype(f32), r_big, qcat, bias_big)

        # layout plumbing back to the PyTorch NCHW convention
        out = out_flat[:, :lanes_raw].reshape(n, h1, w1o, c_out)
        return jnp.transpose(out, (0, 3, 1, 2))

    return forward


# -------------------- deterministic parameter initialization --------------------

def init_params(key):
    k1, k2, k3, k4 = jax.random.split(key, 4)
    fan1 = 2 * 1 * 2
    b1 = 1.0 / math.sqrt(fan1)
    fan2 = 16 * 2 * 1
    b2 = 1.0 / math.sqrt(fan2)
    return dict(
        wc1=jax.random.uniform(k1, (16, 2, 1, 2), jnp.float32, -b1, b1),
        bc1=jax.random.uniform(k2, (16,), jnp.float32, -b1, b1),
        wc2=jax.random.uniform(k3, (16, 16, 2, 1), jnp.float32, -b2, b2),
        bc2=jax.random.uniform(k4, (16,), jnp.float32, -b2, b2),
    )


# ------------------------------------ main ------------------------------------

if __name__ == "__main__":
    key = jax.random.PRNGKey(0)
    pkey, xkey = jax.random.split(key)
    params = init_params(pkey)

    x = jax.random.normal(xkey, (2, 2, 16, 16), jnp.float32)   # NCHW, C_in=2

    forward = make_forward(params, x.shape)   # constants built once, off the hot path
    out = jax.block_until_ready(forward(x))
    assert out.shape == (2, 16, 9, 19), out.shape

    # Pure-JAX reference (same center-crop alignment) to validate the kernel.
    dn = ("NCHW", "OIHW", "NCHW")
    y1_ref = lax.conv_general_dilated(
        x, params["wc1"], window_strides=(2, 1),
        padding=((1, 1), (2, 2)), dimension_numbers=dn,
    ) + params["bc1"].reshape(1, -1, 1, 1)
    y2_ref = lax.conv_general_dilated(
        y1_ref, params["wc2"], window_strides=(1, 1),
        padding=((3, 3), (1, 1)), rhs_dilation=(2, 1), dimension_numbers=dn,
    ) + params["bc2"].reshape(1, -1, 1, 1)
    h1, w1 = y1_ref.shape[2], y1_ref.shape[3]
    v2_ref = jnp.tanh(y1_ref + y2_ref[:, :, 2:2 + h1, 1:1 + w1])

    err = float(jnp.max(jnp.abs(out - v2_ref)))
    assert err < 1e-4, err
    print("KERNEL_OK")
</pallas_src>

<mosaic_0001>
module attributes {stable_mosaic.version = 11 : i64} {
  func.func @_fused_kernel(%arg0: i32, %arg1: memref<2x2x16x16xf32, #tpu.memory_space<vmem>>, %arg2: memref<3x18x32xf32, #tpu.memory_space<vmem>>, %arg3: memref<96x384xf32, #tpu.memory_space<vmem>>, %arg4: memref<18x384xf32, #tpu.memory_space<vmem>>, %arg5: memref<18x384xf32, #tpu.memory_space<vmem>>) attributes {dimension_semantics = [#tpu.dimension_semantics<arbitrary>], iteration_bounds = array<i64: 1>, scalar_prefetch = 0 : i64, scratch_operands = 0 : i64, tpu.core_type = #tpu.core_type<tc>, window_params = [{pipeline_mode = #tpu.pipeline_mode<synchronous>, transform_indices = @transform_0, window_bounds = array<i64: 2, 2, 16, 16>}, {pipeline_mode = #tpu.pipeline_mode<synchronous>, transform_indices = @transform_1, window_bounds = array<i64: 3, 18, 32>}, {pipeline_mode = #tpu.pipeline_mode<synchronous>, transform_indices = @transform_2, window_bounds = array<i64: 96, 384>}, {pipeline_mode = #tpu.pipeline_mode<synchronous>, transform_indices = @transform_3, window_bounds = array<i64: 18, 384>}, {pipeline_mode = #tpu.pipeline_mode<synchronous>, transform_indices = @transform_4, window_bounds = array<i64: 18, 384>}]} {
    %c0 = arith.constant 0 : index
    %c0_0 = arith.constant 0 : index
    %c0_1 = arith.constant 0 : index
    %c0_2 = arith.constant 0 : index
    %0 = vector.load %arg1[%c0, %c0_0, %c0_1, %c0_2] : memref<2x2x16x16xf32, #tpu.memory_space<vmem>>, vector<2x2x16x16xf32>
    %1 = vector.extract_strided_slice %0 {offsets = [0, 0, 0, 0], sizes = [2, 1, 16, 16], strides = [1, 1, 1, 1]} : vector<2x2x16x16xf32> to vector<2x1x16x16xf32>
    %2 = vector.shape_cast %1 : vector<2x1x16x16xf32> to vector<2x16x16xf32>
    %3 = vector.extract_strided_slice %0 {offsets = [0, 1, 0, 0], sizes = [2, 1, 16, 16], strides = [1, 1, 1, 1]} : vector<2x2x16x16xf32> to vector<2x1x16x16xf32>
    %4 = vector.shape_cast %3 : vector<2x1x16x16xf32> to vector<2x16x16xf32>
    %5 = tpu.concatenate %2, %4 in 2 : vector<2x16x16xf32>, vector<2x16x16xf32> -> vector<2x16x32xf32>
    %6 = vector.shape_cast %5 : vector<2x16x32xf32> to vector<32x32xf32>
    %c0_3 = arith.constant 0 : index
    %c0_4 = arith.constant 0 : index
    %c0_5 = arith.constant 0 : index
    %7 = vector.load %arg2[%c0_3, %c0_4, %c0_5] : memref<3x18x32xf32, #tpu.memory_space<vmem>>, vector<1x18x32xf32>
    %8 = vector.shape_cast %7 : vector<1x18x32xf32> to vector<18x32xf32>
    %cst = arith.constant dense<0.000000e+00> : vector<18x32xf32>
    %9 = tpu.matmul %8, %6, %cst {dimension_numbers = #tpu.dot_dimension_numbers<[1], [0], [0], [1], [0, 0, 1, 1], [], []>} : vector<18x32xf32>, vector<32x32xf32>, vector<18x32xf32> -> vector<18x32xf32>
    %c1 = arith.constant 1 : index
    %c0_6 = arith.constant 0 : index
    %c0_7 = arith.constant 0 : index
    %10 = vector.load %arg2[%c1, %c0_6, %c0_7] : memref<3x18x32xf32, #tpu.memory_space<vmem>>, vector<1x18x32xf32>
    %11 = vector.shape_cast %10 : vector<1x18x32xf32> to vector<18x32xf32>
    %cst_8 = arith.constant dense<0.000000e+00> : vector<18x32xf32>
    %12 = tpu.matmul %11, %6, %cst_8 {dimension_numbers = #tpu.dot_dimension_numbers<[1], [0], [0], [1], [0, 0, 1, 1], [], []>} : vector<18x32xf32>, vector<32x32xf32>, vector<18x32xf32> -> vector<18x32xf32>
    %c2 = arith.constant 2 : index
    %c0_9 = arith.constant 0 : index
    %c0_10 = arith.constant 0 : index
    %13 = vector.load %arg2[%c2, %c0_9, %c0_10] : memref<3x18x32xf32, #tpu.memory_space<vmem>>, vector<1x18x32xf32>
    %14 = vector.shape_cast %13 : vector<1x18x32xf32> to vector<18x32xf32>
    %cst_11 = arith.constant dense<0.000000e+00> : vector<18x32xf32>
    %15 = tpu.matmul %14, %6, %cst_11 {dimension_numbers = #tpu.dot_dimension_numbers<[1], [0], [0], [1], [0, 0, 1, 1], [], []>} : vector<18x32xf32>, vector<32x32xf32>, vector<18x32xf32> -> vector<18x32xf32>
    %16 = tpu.concatenate %9, %12, %15 in 1 : vector<18x32xf32>, vector<18x32xf32>, vector<18x32xf32> -> vector<18x96xf32>
    %c0_12 = arith.constant 0 : index
    %c0_13 = arith.constant 0 : index
    %17 = vector.load %arg3[%c0_12, %c0_13] : memref<96x384xf32, #tpu.memory_space<vmem>>, vector<96x384xf32>
    %cst_14 = arith.constant dense<0.000000e+00> : vector<18x384xf32>
    %18 = tpu.matmul %16, %17, %cst_14 {dimension_numbers = #tpu.dot_dimension_numbers<[1], [0], [0], [1], [0, 0, 1, 1], [], []>} : vector<18x96xf32>, vector<96x384xf32>, vector<18x384xf32> -> vector<18x384xf32>
    %c0_15 = arith.constant 0 : index
    %c0_16 = arith.constant 0 : index
    %19 = vector.load %arg4[%c0_15, %c0_16] : memref<18x384xf32, #tpu.memory_space<vmem>>, vector<18x384xf32>
    %20 = arith.addf %18, %19 : vector<18x384xf32>
    %21 = math.tanh %20 : vector<18x384xf32>
    %c0_17 = arith.constant 0 : index
    %c0_18 = arith.constant 0 : index
    %22 = vector.load %arg5[%c0_17, %c0_18] : memref<18x384xf32, #tpu.memory_space<vmem>>, vector<18x384xf32>
    tpu.vector_store %arg5[%c0_17, %c0_18], %21 {strides = array<i32>} : memref<18x384xf32, #tpu.memory_space<vmem>>, vector<18x384xf32>,
    return
  }
  func.func @transform_0(%arg0: i32) -> (i32, i32, i32, i32) {
    %c0_i32 = arith.constant 0 : i32
    %c0_i32_0 = arith.constant 0 : i32
    %c0_i32_1 = arith.constant 0 : i32
    %c0_i32_2 = arith.constant 0 : i32
    %c0_i32_3 = arith.constant 0 : i32
    return %c0_i32, %c0_i32_0, %c0_i32_1, %c0_i32_2 : i32, i32, i32, i32
  }
  func.func @transform_1(%arg0: i32) -> (i32, i32, i32) {
    %c0_i32 = arith.constant 0 : i32
    %c0_i32_0 = arith.constant 0 : i32
    %c0_i32_1 = arith.constant 0 : i32
    %c0_i32_2 = arith.constant 0 : i32
    return %c0_i32, %c0_i32_0, %c0_i32_1 : i32, i32, i32
  }
  func.func @transform_2(%arg0: i32) -> (i32, i32) {
    %c0_i32 = arith.constant 0 : i32
    %c0_i32_0 = arith.constant 0 : i32
    %c0_i32_1 = arith.constant 0 : i32
    return %c0_i32, %c0_i32_0 : i32, i32
  }
  func.func @transform_3(%arg0: i32) -> (i32, i32) {
    %c0_i32 = arith.constant 0 : i32
    %c0_i32_0 = arith.constant 0 : i32
    %c0_i32_1 = arith.constant 0 : i32
    return %c0_i32, %c0_i32_0 : i32, i32
  }
  func.func @transform_4(%arg0: i32) -> (i32, i32) {
    %c0_i32 = arith.constant 0 : i32
    %c0_i32_0 = arith.constant 0 : i32
    %c0_i32_1 = arith.constant 0 : i32
    return %c0_i32, %c0_i32_0 : i32, i32
  }
}

</mosaic_0001>

<llo_original>
// kernel: forward.1
$region0: #{forward.1}
  #allocation0 [shape = 'u32[]', space=smem, size = 0x4, offset = 0x4, fixed_abs, tag = 'smem constant byte address 0x4 - core index']
  #allocation1 [shape = 'u32[144,128]{1,0:T(1,128)}', space=vmem, size = 0x12000, scoped, tag = 'internal scratch']
  %s0 = inlined_call_operand.hbm [shape: f32[2,2,16,16], index: 0, kind: input, shape index: {}]
  %s1 = inlined_call_operand.hbm [shape: f32[3,18,32], index: 1, kind: input, shape index: {}]
  %s2 = inlined_call_operand.hbm [shape: f32[96,384], index: 2, kind: input, shape index: {}]
  %s3 = inlined_call_operand.hbm [shape: f32[18,384], index: 3, kind: input, shape index: {}]
  %s4 = inlined_call_operand.vmem [shape: f32[18,384], index: 4, kind: output, shape index: {}]
  %s5 = sld [smem:[#allocation0]]
  $region42: #{forward.1} parent=0
    _
  %s7 = ssub.s32 1, %s5
  %s8 = scalar_select 0, %s7, %s5
  $region1: #{forward.1} parent=0
    #allocation2 [shape = 'u8[32768]{0}', space=vmem, size = 0x8000, scoped, tag = 'input window, operand 0, single buffered']
    #allocation3 [shape = 's32[1]{0}', space=sflag, size = 0x4, scoped, tag = 'scoped memory for forward.1']
    #allocation4 [shape = 'u8[36864]{0}', space=vmem, size = 0x9000, scoped, tag = 'input window, operand 1, single buffered']
    #allocation5 [shape = 's32[1]{0}', space=sflag, size = 0x4, scoped, tag = 'scoped memory for forward.1']
    #allocation6 [shape = 'u8[147456]{0}', space=vmem, size = 0x24000, scoped, tag = 'input window, operand 2, single buffered']
    #allocation7 [shape = 'u8[36864]{0}', space=vmem, size = 0x9000, scoped, tag = 'input window, operand 3, single buffered']
    #allocation8 [shape = 's32[1]{0}', space=sflag, size = 0x4, scoped, tag = 'scoped memory for forward.1']
    %9 = vsyncpa [#allocation3], 0
    %10 = vsyncpa [#allocation5], 0
    %11 = vsyncpa [#allocation8], 0
    // Predicated region
    $region2: #{forward.1} parent=1 // pred_check
      _
    $region3: #{forward.1} parent=1 // pred_check_branch
      %13 = sbr.rel (0) target = $region5
    $region4: #{forward.1} parent=1 // pred_region
      %s15 = ssub.s32 1024, 1024
      %16 = vsyncadd [#allocation3], %s15
      %s17 = sshll.u32 [#allocation2], 4
      %s18 = int_to_ptr.vmem [resolvable:$true] %s17
      %23 = dma.hbm_to_vmem [thread:$0]  %s0, 1024, %s18, [#allocation3], 128, 128, 8
    $region5: #{forward.1} parent=1 // pred_fallthru
      _
    // Predicated region
    $region6: #{forward.1} parent=1 // pred_check
      _
    $region7: #{forward.1} parent=1 // pred_check_branch
      %25 = sbr.rel (0) target = $region9
    $region8: #{forward.1} parent=1 // pred_region
      %s27 = ssub.s32 1152, 1152
      %28 = vsyncadd [#allocation5], %s27
      %s29 = sshll.u32 [#allocation4], 4
      %s30 = int_to_ptr.vmem [resolvable:$true] %s29
      %35 = dma.hbm_to_vmem [thread:$0]  %s1, 1152, %s30, [#allocation5], 128, 128, 8
    $region9: #{forward.1} parent=1 // pred_fallthru
      _
    // Predicated region
    $region10: #{forward.1} parent=1 // pred_check
      _
    $region11: #{forward.1} parent=1 // pred_check_branch
      %37 = sbr.rel (0) target = $region13
    $region12: #{forward.1} parent=1 // pred_region
      %s39 = ssub.s32 4608, 4608
      %40 = vsyncadd [#allocation5], %s39
      %s41 = sshll.u32 [#allocation6], 4
      %s42 = int_to_ptr.vmem [resolvable:$true] %s41
      %47 = dma.hbm_to_vmem [thread:$0]  %s2, 4608, %s42, [#allocation5], 384, 384, 24
    $region13: #{forward.1} parent=1 // pred_fallthru
      _
    // Predicated region
    $region14: #{forward.1} parent=1 // pred_check
      _
    $region15: #{forward.1} parent=1 // pred_check_branch
      %49 = sbr.rel (0) target = $region17
    $region16: #{forward.1} parent=1 // pred_region
      %s51 = ssub.s32 1152, 1152
      %52 = vsyncadd [#allocation8], %s51
      %s53 = sshll.u32 [#allocation7], 4
      %s54 = int_to_ptr.vmem [resolvable:$true] %s53
      %59 = dma.hbm_to_vmem [thread:$0]  %s3, 1152, %s54, [#allocation8], 384, 384, 24
    $region17: #{forward.1} parent=1 // pred_fallthru
      _
    // Predicated region
    $region18: #{forward.1} parent=1 // pred_check
      _
    $region19: #{forward.1} parent=1 // pred_check_branch
      %61 = sbr.rel (0) target = $region21
    $region20: #{forward.1} parent=1 // pred_region
      %62 = dma.done [#allocation3], 1024
    $region21: #{forward.1} parent=1 // pred_fallthru
      _
    // Predicated region
    $region22: #{forward.1} parent=1 // pred_check
      _
    $region23: #{forward.1} parent=1 // pred_check_branch
      %64 = sbr.rel (0) target = $region25
    $region24: #{forward.1} parent=1 // pred_region
      %65 = dma.done [#allocation5], 1152
    $region25: #{forward.1} parent=1 // pred_fallthru
      _
    // Predicated region
    $region26: #{forward.1} parent=1 // pred_check
      _
    $region27: #{forward.1} parent=1 // pred_check_branch
      %67 = sbr.rel (0) target = $region29
    $region28: #{forward.1} parent=1 // pred_region
      %68 = dma.done [#allocation5], 4608
    $region29: #{forward.1} parent=1 // pred_fallthru
      _
    // Predicated region
    $region30: #{forward.1} parent=1 // pred_check
      _
    $region31: #{forward.1} parent=1 // pred_check_branch
      %70 = sbr.rel (0) target = $region33
    $region32: #{forward.1} parent=1 // pred_region
      %71 = dma.done [#allocation8], 1152
    $region33: #{forward.1} parent=1 // pred_fallthru
      _
    %v72 = vld [vmem:[#allocation2] sm:$0xff]
    %v73 = vld [vmem:[#allocation2 + $0x8] sm:$0xff]
    %v74 = vld [vmem:[#allocation2 + $0x10] sm:$0xff]
    %v75 = vld [vmem:[#allocation2 + $0x18] sm:$0xff]
    %v76 = vld [vmem:[#allocation2 + $0x20] sm:$0xff]
    %v77 = vld [vmem:[#allocation2 + $0x28] sm:$0xff]
    %v78 = vld [vmem:[#allocation2 + $0x30] sm:$0xff]
    %v79 = vld [vmem:[#allocation2 + $0x38] sm:$0xff]
    %84 = vrot.lane.b32.xlu0 %v74, 16
    %v85 = vpop.permute.xlu0 %84
    %86 = vrot.lane.b32.xlu0 %v75, 16
    %v87 = vpop.permute.xlu0 %86
    %88 = vrot.lane.b32.xlu0 %v78, 16
    %v89 = vpop.permute.xlu0 %88
    %90 = vrot.lane.b32.xlu0 %v79, 16
    %v91 = vpop.permute.xlu0 %90
    %vm96 = vcmask 130048
    %v97 = vsel %vm96, %v72, %v85
    %v98 = vsel %vm96, %v73, %v87
    %v99 = vsel %vm96, %v76, %v89
    %v100 = vsel %vm96, %v77, %v91
    %v101 = vld [vmem:[#allocation4] sm:$0xff]
    %v102 = vld [vmem:[#allocation4 + $0x8] sm:$0xff]
    %v103 = vld [vmem:[#allocation4 + $0x10] sm:$0x3]
    %vm104 = vcmask 261120
    %v106 = vsel %vm104, %v101, 0
    %v109 = vsel %vm104, %v102, 0
    %v112 = vsel %vm104, %v103, 0
    %114 = vmatprep.subr.mxu0 0.0
    %115 = vmatpush1.msra.mxu0 0.0
    %116 = vmatprep.subr.mxu0 0.0
    %117 = vmatpush1.msra.mxu0 0.0
    %118 = vmatprep.subr.mxu0 0.0
    %119 = vmatpush1.msra.mxu0 0.0
    %120 = vmatprep.subr.mxu0 0.0
    %121 = vmatpush1.msra.mxu0 0.0
    %122 = vmatprep.subr.mxu0 0.0
    %123 = vmatpush1.msra.mxu0 0.0
    %124 = vmatprep.subr.mxu0 0.0
    %125 = vmatpush1.msra.mxu0 0.0
    %126 = vmatprep.subr.mxu0 0.0
    %127 = vmatpush1.msra.mxu0 0.0
    %128 = vmatprep.subr.mxu0 0.0
    %129 = vmatpush1.msra.mxu0 0.0
    %130 = vmatprep.subr.mxu0 0.0
    %131 = vmatpush1.msra.mxu0 0.0
    %132 = vmatprep.subr.mxu0 0.0
    %133 = vmatpush1.msra.mxu0 0.0
    %134 = vmatprep.subr.mxu0 0.0
    %135 = vmatpush1.msra.mxu0 0.0
    %136 = vmatprep.subr.mxu0 0.0
    %137 = vmatpush1.msra.mxu0 0.0
    %138 = vmatprep.subr.mxu0 0.0
    %139 = vmatpush1.msra.mxu0 %v100
    %140 = vmatprep.subr.mxu0 0.0
    %141 = vmatpush1.msra.mxu0 %v99
    %142 = vmatprep.subr.mxu0 0.0
    %143 = vmatpush1.msra.mxu0 %v98
    %144 = vmatprep.subr.mxu0 0.0
    %145 = vmatpush1.msra.mxu0 %v97
    %146 = vmatprep.subr.mxu0 0.0
    %147 = vmatpush2.msra.mxu0 0.0
    %148 = vmatprep.subr.mxu0 0.0
    %149 = vmatpush2.msra.mxu0 0.0
    %150 = vmatprep.subr.mxu0 0.0
    %151 = vmatpush2.msra.mxu0 0.0
    %152 = vmatprep.subr.mxu0 0.0
    %153 = vmatpush2.msra.mxu0 0.0
    %154 = vmatprep.subr.mxu0 0.0
    %155 = vmatpush2.msra.mxu0 0.0
    %156 = vmatprep.subr.mxu0 0.0
    %157 = vmatpush2.msra.mxu0 0.0
    %158 = vmatprep.subr.mxu0 0.0
    %159 = vmatpush2.msra.mxu0 0.0
    %160 = vmatprep.subr.mxu0 0.0
    %161 = vmatpush2.msra.mxu0 0.0
    %162 = vmatprep.subr.mxu0 0.0
    %163 = vmatpush2.msra.mxu0 0.0
    %164 = vmatprep.subr.mxu0 0.0
    %165 = vmatpush2.msra.mxu0 0.0
    %166 = vmatprep.subr.mxu0 0.0
    %167 = vmatpush2.msra.mxu0 0.0
    %168 = vmatprep.subr.mxu0 0.0
    %169 = vmatpush2.msra.mxu0 0.0
    %170 = vmatprep.subr.mxu0 0.0
    %171 = vmatpush2.msra.mxu0 0.0
    %172 = vmatprep.subr.mxu0 0.0
    %173 = vmatpush2.msra.mxu0 0.0
    %174 = vmatprep.subr.mxu0 0.0
    %175 = vmatpush2.msra.mxu0 0.0
    %176 = vmatprep.subr.mxu0 0.0
    %177 = vmatpush2.msra.mxu0 0.0
    %178 = vmatprep.mubr.f32.mxu0 0.0
    %179 = vmatmul.mubr.f32.gmra.mxu0 %v106
    %v180 = vpop.f32.mrf.mxu0
    %v181 = vadd.f32 0.0, %v180
    %v182 = vpop.f32.mrf.mxu0
    %183 = vmatprep.mubr.f32.mxu0 0.0
    %184 = vmatmul.mubr.f32.gmra.mxu0 %v109
    %v185 = vpop.f32.mrf.mxu0
    %v186 = vadd.f32 0.0, %v185
    %v187 = vpop.f32.mrf.mxu0
    %188 = vmatprep.mubr.f32.mxu0 0.0
    %189 = vmatmul.mubr.f32.gmra.mxu0 %v112
    %v190 = vpop.f32.mrf.mxu0
    %v191 = vadd.f32 0.0, %v190
    %v192 = vpop.f32.mrf.mxu0
    %193 = vdwg.mxu0
    %s194 = scalar_lea.vmem [#allocation4], 24
    %v195 = vld [vmem:[%s194] sm:$0xff]
    %v196 = vld [vmem:[%s194 + $0x8] sm:$0xff]
    %v197 = vld [vmem:[%s194 + $0x10] sm:$0x3]
    %v199 = vsel %vm104, %v195, 0
    %v202 = vsel %vm104, %v196, 0
    %v205 = vsel %vm104, %v197, 0
    %207 = vmatprep.subr.mxu0 0.0
    %208 = vmatpush1.msra.mxu0 0.0
    %209 = vmatprep.subr.mxu0 0.0
    %210 = vmatpush1.msra.mxu0 0.0
    %211 = vmatprep.subr.mxu0 0.0
    %212 = vmatpush1.msra.mxu0 0.0
    %213 = vmatprep.subr.mxu0 0.0
    %214 = vmatpush1.msra.mxu0 0.0
    %215 = vmatprep.subr.mxu0 0.0
    %216 = vmatpush1.msra.mxu0 0.0
    %217 = vmatprep.subr.mxu0 0.0
    %218 = vmatpush1.msra.mxu0 0.0
    %219 = vmatprep.subr.mxu0 0.0
    %220 = vmatpush1.msra.mxu0 0.0
    %221 = vmatprep.subr.mxu0 0.0
    %222 = vmatpush1.msra.mxu0 0.0
    %223 = vmatprep.subr.mxu0 0.0
    %224 = vmatpush1.msra.mxu0 0.0
    %225 = vmatprep.subr.mxu0 0.0
    %226 = vmatpush1.msra.mxu0 0.0
    %227 = vmatprep.subr.mxu0 0.0
    %228 = vmatpush1.msra.mxu0 0.0
    %229 = vmatprep.subr.mxu0 0.0
    %230 = vmatpush1.msra.mxu0 0.0
    %231 = vmatprep.subr.mxu0 0.0
    %232 = vmatpush1.msra.mxu0 %v100
    %233 = vmatprep.subr.mxu0 0.0
    %234 = vmatpush1.msra.mxu0 %v99
    %235 = vmatprep.subr.mxu0 0.0
    %236 = vmatpush1.msra.mxu0 %v98
    %237 = vmatprep.subr.mxu0 0.0
    %238 = vmatpush1.msra.mxu0 %v97
    %239 = vmatprep.subr.mxu0 0.0
    %240 = vmatpush2.msra.mxu0 0.0
    %241 = vmatprep.subr.mxu0 0.0
    %242 = vmatpush2.msra.mxu0 0.0
    %243 = vmatprep.subr.mxu0 0.0
    %244 = vmatpush2.msra.mxu0 0.0
    %245 = vmatprep.subr.mxu0 0.0
    %246 = vmatpush2.msra.mxu0 0.0
    %247 = vmatprep.subr.mxu0 0.0
    %248 = vmatpush2.msra.mxu0 0.0
    %249 = vmatprep.subr.mxu0 0.0
    %250 = vmatpush2.msra.mxu0 0.0
    %251 = vmatprep.subr.mxu0 0.0
    %252 = vmatpush2.msra.mxu0 0.0
    %253 = vmatprep.subr.mxu0 0.0
    %254 = vmatpush2.msra.mxu0 0.0
    %255 = vmatprep.subr.mxu0 0.0
    %256 = vmatpush2.msra.mxu0 0.0
    %257 = vmatprep.subr.mxu0 0.0
    %258 = vmatpush2.msra.mxu0 0.0
    %259 = vmatprep.subr.mxu0 0.0
    %260 = vmatpush2.msra.mxu0 0.0
    %261 = vmatprep.subr.mxu0 0.0
    %262 = vmatpush2.msra.mxu0 0.0
    %263 = vmatprep.subr.mxu0 0.0
    %264 = vmatpush2.msra.mxu0 0.0
    %265 = vmatprep.subr.mxu0 0.0
    %266 = vmatpush2.msra.mxu0 0.0
    %267 = vmatprep.subr.mxu0 0.0
    %268 = vmatpush2.msra.mxu0 0.0
    %269 = vmatprep.subr.mxu0 0.0
    %270 = vmatpush2.msra.mxu0 0.0
    %271 = vmatprep.mubr.f32.mxu0 0.0
    %272 = vmatmul.mubr.f32.gmra.mxu0 %v199
    %v273 = vpop.f32.mrf.mxu0
    %v274 = vadd.f32 0.0, %v273
    %v275 = vpop.f32.mrf.mxu0
    %276 = vmatprep.mubr.f32.mxu0 0.0
    %277 = vmatmul.mubr.f32.gmra.mxu0 %v202
    %v278 = vpop.f32.mrf.mxu0
    %v279 = vadd.f32 0.0, %v278
    %v280 = vpop.f32.mrf.mxu0
    %281 = vmatprep.mubr.f32.mxu0 0.0
    %282 = vmatmul.mubr.f32.gmra.mxu0 %v205
    %v283 = vpop.f32.mrf.mxu0
    %v284 = vadd.f32 0.0, %v283
    %v285 = vpop.f32.mrf.mxu0
    %286 = vdwg.mxu0
    %s287 = scalar_lea.vmem [#allocation4], 48
    %v288 = vld [vmem:[%s287] sm:$0xff]
    %v289 = vld [vmem:[%s287 + $0x8] sm:$0xff]
    %v290 = vld [vmem:[%s287 + $0x10] sm:$0x3]
    %v292 = vsel %vm104, %v288, 0
    %v295 = vsel %vm104, %v289, 0
    %v298 = vsel %vm104, %v290, 0
    %300 = vmatprep.subr.mxu0 0.0
    %301 = vmatpush1.msra.mxu0 0.0
    %302 = vmatprep.subr.mxu0 0.0
    %303 = vmatpush1.msra.mxu0 0.0
    %304 = vmatprep.subr.mxu0 0.0
    %305 = vmatpush1.msra.mxu0 0.0
    %306 = vmatprep.subr.mxu0 0.0
    %307 = vmatpush1.msra.mxu0 0.0
    %308 = vmatprep.subr.mxu0 0.0
    %309 = vmatpush1.msra.mxu0 0.0
    %310 = vmatprep.subr.mxu0 0.0
    %311 = vmatpush1.msra.mxu0 0.0
    %312 = vmatprep.subr.mxu0 0.0
    %313 = vmatpush1.msra.mxu0 0.0
    %314 = vmatprep.subr.mxu0 0.0
    %315 = vmatpush1.msra.mxu0 0.0
    %316 = vmatprep.subr.mxu0 0.0
    %317 = vmatpush1.msra.mxu0 0.0
    %318 = vmatprep.subr.mxu0 0.0
    %319 = vmatpush1.msra.mxu0 0.0
    %320 = vmatprep.subr.mxu0 0.0
    %321 = vmatpush1.msra.mxu0 0.0
    %322 = vmatprep.subr.mxu0 0.0
    %323 = vmatpush1.msra.mxu0 0.0
    %324 = vmatprep.subr.mxu0 0.0
    %325 = vmatpush1.msra.mxu0 %v100
    %326 = vmatprep.subr.mxu0 0.0
    %327 = vmatpush1.msra.mxu0 %v99
    %328 = vmatprep.subr.mxu0 0.0
    %329 = vmatpush1.msra.mxu0 %v98
    %330 = vmatprep.subr.mxu0 0.0
    %331 = vmatpush1.msra.mxu0 %v97
    %332 = vmatprep.subr.mxu0 0.0
    %333 = vmatpush2.msra.mxu0 0.0
    %334 = vmatprep.subr.mxu0 0.0
    %335 = vmatpush2.msra.mxu0 0.0
    %336 = vmatprep.subr.mxu0 0.0
    %337 = vmatpush2.msra.mxu0 0.0
    %338 = vmatprep.subr.mxu0 0.0
    %339 = vmatpush2.msra.mxu0 0.0
    %340 = vmatprep.subr.mxu0 0.0
    %341 = vmatpush2.msra.mxu0 0.0
    %342 = vmatprep.subr.mxu0 0.0
    %343 = vmatpush2.msra.mxu0 0.0
    %344 = vmatprep.subr.mxu0 0.0
    %345 = vmatpush2.msra.mxu0 0.0
    %346 = vmatprep.subr.mxu0 0.0
    %347 = vmatpush2.msra.mxu0 0.0
    %348 = vmatprep.subr.mxu0 0.0
    %349 = vmatpush2.msra.mxu0 0.0
    %350 = vmatprep.subr.mxu0 0.0
    %351 = vmatpush2.msra.mxu0 0.0
    %352 = vmatprep.subr.mxu0 0.0
    %353 = vmatpush2.msra.mxu0 0.0
    %354 = vmatprep.subr.mxu0 0.0
    %355 = vmatpush2.msra.mxu0 0.0
    %356 = vmatprep.subr.mxu0 0.0
    %357 = vmatpush2.msra.mxu0 0.0
    %358 = vmatprep.subr.mxu0 0.0
    %359 = vmatpush2.msra.mxu0 0.0
    %360 = vmatprep.subr.mxu0 0.0
    %361 = vmatpush2.msra.mxu0 0.0
    %362 = vmatprep.subr.mxu0 0.0
    %363 = vmatpush2.msra.mxu0 0.0
    %364 = vmatprep.mubr.f32.mxu0 0.0
    %365 = vmatmul.mubr.f32.gmra.mxu0 %v292
    %v366 = vpop.f32.mrf.mxu0
    %v367 = vadd.f32 0.0, %v366
    %v368 = vpop.f32.mrf.mxu0
    %369 = vmatprep.mubr.f32.mxu0 0.0
    %370 = vmatmul.mubr.f32.gmra.mxu0 %v295
    %v371 = vpop.f32.mrf.mxu0
    %v372 = vadd.f32 0.0, %v371
    %v373 = vpop.f32.mrf.mxu0
    %374 = vmatprep.mubr.f32.mxu0 0.0
    %375 = vmatmul.mubr.f32.gmra.mxu0 %v298
    %v376 = vpop.f32.mrf.mxu0
    %v377 = vadd.f32 0.0, %v376
    %v378 = vpop.f32.mrf.mxu0
    %379 = vdwg.mxu0
    %383 = vrot.lane.b32.xlu0 %v274, 32
    %v384 = vpop.permute.xlu0 %383
    %385 = vrot.lane.b32.xlu0 %v279, 32
    %v386 = vpop.permute.xlu0 %385
    %387 = vrot.lane.b32.xlu0 %v284, 32
    %v388 = vpop.permute.xlu0 %387
    %395 = vrot.lane.b32.xlu0 %v367, 64
    %v396 = vpop.permute.xlu0 %395
    %397 = vrot.lane.b32.xlu0 %v372, 64
    %v398 = vpop.permute.xlu0 %397
    %399 = vrot.lane.b32.xlu0 %v377, 64
    %v400 = vpop.permute.xlu0 %399
    %v404 = vsel %vm104, %v181, %v384
    %v405 = vsel %vm104, %v186, %v386
    %v406 = vsel %vm104, %v191, %v388
    %vm407 = vcmask 523264
    %v408 = vsel %vm407, %v404, %v396
    %v409 = vsel %vm407, %v405, %v398
    %v410 = vsel %vm407, %v406, %v400
    %v411 = vld [vmem:[#allocation6] sm:$0xff]
    %v412 = vld [vmem:[#allocation6 + $0x8] sm:$0xff]
    %v413 = vld [vmem:[#allocation6 + $0x10] sm:$0xff]
    %v414 = vld [vmem:[#allocation6 + $0x18] sm:$0xff]
    %v415 = vld [vmem:[#allocation6 + $0x20] sm:$0xff]
    %v416 = vld [vmem:[#allocation6 + $0x28] sm:$0xff]
    %v417 = vld [vmem:[#allocation6 + $0x30] sm:$0xff]
    %v418 = vld [vmem:[#allocation6 + $0x38] sm:$0xff]
    %v419 = vld [vmem:[#allocation6 + $0x40] sm:$0xff]
    %v420 = vld [vmem:[#allocation6 + $0x48] sm:$0xff]
    %v421 = vld [vmem:[#allocation6 + $0x50] sm:$0xff]
    %v422 = vld [vmem:[#allocation6 + $0x58] sm:$0xff]
    %v423 = vld [vmem:[#allocation6 + $0x60] sm:$0xff]
    %v424 = vld [vmem:[#allocation6 + $0x68] sm:$0xff]
    %v425 = vld [vmem:[#allocation6 + $0x70] sm:$0xff]
    %v426 = vld [vmem:[#allocation6 + $0x78] sm:$0xff]
    %v427 = vld [vmem:[#allocation6 + $0x80] sm:$0xff]
    %v428 = vld [vmem:[#allocation6 + $0x88] sm:$0xff]
    %v429 = vld [vmem:[#allocation6 + $0x90] sm:$0xff]
    %v430 = vld [vmem:[#allocation6 + $0x98] sm:$0xff]
    %v431 = vld [vmem:[#allocation6 + $0xa0] sm:$0xff]
    %v432 = vld [vmem:[#allocation6 + $0xa8] sm:$0xff]
    %v433 = vld [vmem:[#allocation6 + $0xb0] sm:$0xff]
    %v434 = vld [vmem:[#allocation6 + $0xb8] sm:$0xff]
    %v435 = vld [vmem:[#allocation6 + $0xc0] sm:$0xff]
    %v436 = vld [vmem:[#allocation6 + $0xc8] sm:$0xff]
    %v437 = vld [vmem:[#allocation6 + $0xd0] sm:$0xff]
    %v438 = vld [vmem:[#allocation6 + $0xd8] sm:$0xff]
    %v439 = vld [vmem:[#allocation6 + $0xe0] sm:$0xff]
    %v440 = vld [vmem:[#allocation6 + $0xe8] sm:$0xff]
    %v441 = vld [vmem:[#allocation6 + $0xf0] sm:$0xff]
    %v442 = vld [vmem:[#allocation6 + $0xf8] sm:$0xff]
    %v443 = vld [vmem:[#allocation6 + $0x100] sm:$0xff]
    %v444 = vld [vmem:[#allocation6 + $0x108] sm:$0xff]
    %v445 = vld [vmem:[#allocation6 + $0x110] sm:$0xff]
    %v446 = vld [vmem:[#allocation6 + $0x118] sm:$0xff]
    %v447 = vld [vmem:[#allocation7] sm:$0xff]
    %v448 = vld [vmem:[#allocation7 + $0x8] sm:$0xff]
    %v449 = vld [vmem:[#allocation7 + $0x10] sm:$0xff]
    %v450 = vld [vmem:[#allocation7 + $0x18] sm:$0xff]
    %v451 = vld [vmem:[#allocation7 + $0x20] sm:$0xff]
    %v452 = vld [vmem:[#allocation7 + $0x28] sm:$0xff]
    %v453 = vld [vmem:[#allocation7 + $0x30] sm:$0x3]
    %v454 = vld [vmem:[#allocation7 + $0x38] sm:$0x3]
    %v455 = vld [vmem:[#allocation7 + $0x40] sm:$0x3]
    %vm456 = vcmask 785408
    %v458 = vsel %vm456, %v408, 0
    %v461 = vsel %vm456, %v409, 0
    %v464 = vsel %vm456, %v410, 0
    %466 = vmatprep.subr.mxu0 0.0
    %467 = vmatpush1.msra.mxu0 0.0
    %468 = vmatprep.subr.mxu0 0.0
    %469 = vmatpush1.msra.mxu0 0.0
    %470 = vmatprep.subr.mxu0 0.0
    %471 = vmatpush1.msra.mxu0 0.0
    %472 = vmatprep.subr.mxu0 0.0
    %473 = vmatpush1.msra.mxu0 0.0
    %474 = vmatprep.subr.mxu0 %v445
    %475 = vmatpush1.msra.mxu0 %v444
    %476 = vmatprep.subr.mxu0 %v442
    %477 = vmatpush1.msra.mxu0 %v441
    %478 = vmatprep.subr.mxu0 %v439
    %479 = vmatpush1.msra.mxu0 %v438
    %480 = vmatprep.subr.mxu0 %v436
    %481 = vmatpush1.msra.mxu0 %v435
    %482 = vmatprep.subr.mxu0 %v433
    %483 = vmatpush1.msra.mxu0 %v432
    %484 = vmatprep.subr.mxu0 %v430
    %485 = vmatpush1.msra.mxu0 %v429
    %486 = vmatprep.subr.mxu0 %v427
    %487 = vmatpush1.msra.mxu0 %v426
    %488 = vmatprep.subr.mxu0 %v424
    %489 = vmatpush1.msra.mxu0 %v423
    %490 = vmatprep.subr.mxu0 %v421
    %491 = vmatpush1.msra.mxu0 %v420
    %492 = vmatprep.subr.mxu0 %v418
    %493 = vmatpush1.msra.mxu0 %v417
    %494 = vmatprep.subr.mxu0 %v415
    %495 = vmatpush1.msra.mxu0 %v414
    %496 = vmatprep.subr.mxu0 %v412
    %497 = vmatpush1.msra.mxu0 %v411
    %498 = vmatprep.subr.mxu0 0.0
    %499 = vmatpush2.msra.mxu0 0.0
    %500 = vmatprep.subr.mxu0 0.0
    %501 = vmatpush2.msra.mxu0 0.0
    %502 = vmatprep.subr.mxu0 0.0
    %503 = vmatpush2.msra.mxu0 0.0
    %504 = vmatprep.subr.mxu0 0.0
    %505 = vmatpush2.msra.mxu0 0.0
    %506 = vmatprep.subr.mxu0 0.0
    %507 = vmatpush2.msra.mxu0 0.0
    %508 = vmatprep.subr.mxu0 0.0
    %509 = vmatpush2.msra.mxu0 0.0
    %510 = vmatprep.subr.mxu0 0.0
    %511 = vmatpush2.msra.mxu0 0.0
    %512 = vmatprep.subr.mxu0 0.0
    %513 = vmatpush2.msra.mxu0 0.0
    %514 = vmatprep.subr.mxu0 0.0
    %515 = vmatpush2.msra.mxu0 0.0
    %516 = vmatprep.subr.mxu0 0.0
    %517 = vmatpush2.msra.mxu0 0.0
    %518 = vmatprep.subr.mxu0 0.0
    %519 = vmatpush2.msra.mxu0 0.0
    %520 = vmatprep.subr.mxu0 0.0
    %521 = vmatpush2.msra.mxu0 0.0
    %522 = vmatprep.subr.mxu0 0.0
    %523 = vmatpush2.msra.mxu0 0.0
    %524 = vmatprep.subr.mxu0 0.0
    %525 = vmatpush2.msra.mxu0 0.0
    %526 = vmatprep.subr.mxu0 0.0
    %527 = vmatpush2.msra.mxu0 0.0
    %528 = vmatprep.subr.mxu0 0.0
    %529 = vmatpush2.msra.mxu0 0.0
    %530 = vmatprep.mubr.f32.mxu0 0.0
    %531 = vmatmul.mubr.f32.gmra.mxu0 %v458
    %v532 = vpop.f32.mrf.mxu0
    %v533 = vadd.f32 %v447, %v532
    %v534 = vpop.f32.mrf.mxu0
    %v535 = vadd.f32 %v448, %v534
    %536 = vmatprep.mubr.f32.mxu0 0.0
    %537 = vmatmul.mubr.f32.gmra.mxu0 %v461
    %v538 = vpop.f32.mrf.mxu0
    %v539 = vadd.f32 %v450, %v538
    %v540 = vpop.f32.mrf.mxu0
    %v541 = vadd.f32 %v451, %v540
    %542 = vmatprep.mubr.f32.mxu0 0.0
    %543 = vmatmul.mubr.f32.gmra.mxu0 %v464
    %v544 = vpop.f32.mrf.mxu0
    %v545 = vadd.f32 %v453, %v544
    %v546 = vpop.f32.mrf.mxu0
    %v547 = vadd.f32 %v454, %v546
    %548 = vdwg.mxu0
    %549 = vmatprep.subr.mxu0 0.0
    %550 = vmatpush1.msra.mxu0 0.0
    %551 = vmatprep.subr.mxu0 0.0
    %552 = vmatpush1.msra.mxu0 0.0
    %553 = vmatprep.subr.mxu0 0.0
    %554 = vmatpush1.msra.mxu0 0.0
    %555 = vmatprep.subr.mxu0 0.0
    %556 = vmatpush1.msra.mxu0 0.0
    %557 = vmatprep.subr.mxu0 0.0
    %558 = vmatpush1.msra.mxu0 %v446
    %559 = vmatprep.subr.mxu0 0.0
    %560 = vmatpush1.msra.mxu0 %v443
    %561 = vmatprep.subr.mxu0 0.0
    %562 = vmatpush1.msra.mxu0 %v440
    %563 = vmatprep.subr.mxu0 0.0
    %564 = vmatpush1.msra.mxu0 %v437
    %565 = vmatprep.subr.mxu0 0.0
    %566 = vmatpush1.msra.mxu0 %v434
    %567 = vmatprep.subr.mxu0 0.0
    %568 = vmatpush1.msra.mxu0 %v431
    %569 = vmatprep.subr.mxu0 0.0
    %570 = vmatpush1.msra.mxu0 %v428
    %571 = vmatprep.subr.mxu0 0.0
    %572 = vmatpush1.msra.mxu0 %v425
    %573 = vmatprep.subr.mxu0 0.0
    %574 = vmatpush1.msra.mxu0 %v422
    %575 = vmatprep.subr.mxu0 0.0
    %576 = vmatpush1.msra.mxu0 %v419
    %577 = vmatprep.subr.mxu0 0.0
    %578 = vmatpush1.msra.mxu0 %v416
    %579 = vmatprep.subr.mxu0 0.0
    %580 = vmatpush1.msra.mxu0 %v413
    %581 = vmatprep.subr.mxu0 0.0
    %582 = vmatpush2.msra.mxu0 0.0
    %583 = vmatprep.subr.mxu0 0.0
    %584 = vmatpush2.msra.mxu0 0.0
    %585 = vmatprep.subr.mxu0 0.0
    %586 = vmatpush2.msra.mxu0 0.0
    %587 = vmatprep.subr.mxu0 0.0
    %588 = vmatpush2.msra.mxu0 0.0
    %589 = vmatprep.subr.mxu0 0.0
    %590 = vmatpush2.msra.mxu0 0.0
    %591 = vmatprep.subr.mxu0 0.0
    %592 = vmatpush2.msra.mxu0 0.0
    %593 = vmatprep.subr.mxu0 0.0
    %594 = vmatpush2.msra.mxu0 0.0
    %595 = vmatprep.subr.mxu0 0.0
    %596 = vmatpush2.msra.mxu0 0.0
    %597 = vmatprep.subr.mxu0 0.0
    %598 = vmatpush2.msra.mxu0 0.0
    %599 = vmatprep.subr.mxu0 0.0
    %600 = vmatpush2.msra.mxu0 0.0
    %601 = vmatprep.subr.mxu0 0.0
    %602 = vmatpush2.msra.mxu0 0.0
    %603 = vmatprep.subr.mxu0 0.0
    %604 = vmatpush2.msra.mxu0 0.0
    %605 = vmatprep.subr.mxu0 0.0
    %606 = vmatpush2.msra.mxu0 0.0
    %607 = vmatprep.subr.mxu0 0.0
    %608 = vmatpush2.msra.mxu0 0.0
    %609 = vmatprep.subr.mxu0 0.0
    %610 = vmatpush2.msra.mxu0 0.0
    %611 = vmatprep.subr.mxu0 0.0
    %612 = vmatpush2.msra.mxu0 0.0
    %613 = vmatprep.mubr.f32.mxu0 0.0
    %614 = vmatmul.mubr.f32.gmra.mxu0 %v458
    %v615 = vpop.f32.mrf.mxu0
    %v616 = vadd.f32 %v449, %v615
    %v617 = vpop.f32.mrf.mxu0
    %618 = vmatprep.mubr.f32.mxu0 0.0
    %619 = vmatmul.mubr.f32.gmra.mxu0 %v461
    %v620 = vpop.f32.mrf.mxu0
    %v621 = vadd.f32 %v452, %v620
    %v622 = vpop.f32.mrf.mxu0
    %623 = vmatprep.mubr.f32.mxu0 0.0
    %624 = vmatmul.mubr.f32.gmra.mxu0 %v464
    %v625 = vpop.f32.mrf.mxu0
    %v626 = vadd.f32 %v455, %v625
    %v627 = vpop.f32.mrf.mxu0
    %628 = vdwg.mxu0
    %v629 = vtanh.pop %v533
    %v630 = vtanh.pop %v535
    %v631 = vtanh.pop %v616
    %v632 = vtanh.pop %v539
    %v633 = vtanh.pop %v541
    %v634 = vtanh.pop %v621
    %v635 = vtanh.pop %v545
    %v636 = vtanh.pop %v547
    %v637 = vtanh.pop %v626
    %638 = vst [vmem:[%s4] sm:$0xff] %v629
    %639 = vst [vmem:[%s4 + $0x8] sm:$0xff] %v630
    %640 = vst [vmem:[%s4 + $0x10] sm:$0xff] %v631
    %641 = vst [vmem:[%s4 + $0x18] sm:$0xff] %v632
    %642 = vst [vmem:[%s4 + $0x20] sm:$0xff] %v633
    %643 = vst [vmem:[%s4 + $0x28] sm:$0xff] %v634
    %644 = vst [vmem:[%s4 + $0x30] sm:$0x3] %v635
    %645 = vst [vmem:[%s4 + $0x38] sm:$0x3] %v636
    %646 = vst [vmem:[%s4 + $0x40] sm:$0x3] %v637
    // Predicated region
    $region34: #{forward.1} parent=1 // pred_check
      _
    $region35: #{forward.1} parent=1 // pred_check_branch
      %648 = sbr.rel (0) target = $region37
    $region36: #{forward.1} parent=1 // pred_region
      _
    $region37: #{forward.1} parent=1 // pred_fallthru
      _
    // Predicated region
    $region38: #{forward.1} parent=1 // pred_check
      _
    $region39: #{forward.1} parent=1 // pred_check_branch
      %650 = sbr.rel (0) target = $region41
    $region40: #{forward.1} parent=1 // pred_region
      _
    $region41: #{forward.1} parent=1 // pred_fallthru
      _
    %651 = vsyncpa [#allocation3], 1
    %652 = vsyncpa [#allocation5], 1
    %653 = vsyncpa [#allocation8], 1

</llo_original>
